<compile_context>
chip_gen: v5e
topology: v5e:2x2
jax: 0.10.0
libtpu: 0.0.40
codegen_flags: <defaults>
</compile_context>

<pallas_src>
import jax
import jax.numpy as jnp
from jax import lax
from jax.experimental import pallas as pl
from jax.experimental.pallas import tpu as pltpu


_SQRT1_2 = 0.7071067811865476


def _gelu_exact(v):
    # Matches PyTorch F.gelu default (erf-based, not tanh approximation).
    return 0.5 * v * (1.0 + lax.erf(v * _SQRT1_2))


def _residual_conv_block_kernel(x_ref, w1_ref, b1_ref, w2_ref, b2_ref, o_ref):
    """One batch element per grid step, lane-dense layout.

    x_ref : (1, H, W*C) f32   activation rows, packed lane index = w*C + c
    w*_ref: (3, W*C, W*C) f32 banded conv weights, leading dim = vertical tap ky
    b*_ref: (1, W*C) f32      bias broadcast over w
    o_ref : (1, H, W*C) f32
    """
    H = x_ref.shape[1]

    # Row-shift matrices (zero-padded shift along H), built once, reused by
    # both convs.  (s_up @ a)[h] = a[h-1] (0 at h=0); (s_dn @ a)[h] = a[h+1].
    r = lax.broadcasted_iota(jnp.int32, (H, H), 0)
    c = lax.broadcasted_iota(jnp.int32, (H, H), 1)
    s_up = (c == r - 1).astype(jnp.float32)
    s_dn = (c == r + 1).astype(jnp.float32)

    def conv3x3(act, w_ref, b_ref):
        # Horizontal taps + channel mixing are inside the banded matrices;
        # vertical taps are the row shifts.
        y_u = jnp.dot(act, w_ref[0], preferred_element_type=jnp.float32)
        y_c = jnp.dot(act, w_ref[1], preferred_element_type=jnp.float32)
        y_d = jnp.dot(act, w_ref[2], preferred_element_type=jnp.float32)
        out = (jnp.dot(s_up, y_u, preferred_element_type=jnp.float32)
               + y_c
               + jnp.dot(s_dn, y_d, preferred_element_type=jnp.float32))
        return out + b_ref[...]

    x = x_ref[0]                                   # (H, W*C)
    out = conv3x3(_gelu_exact(x), w1_ref, b1_ref)
    out = conv3x3(_gelu_exact(out), w2_ref, b2_ref)
    o_ref[0] = (x + out).astype(o_ref.dtype)


def _banded_conv_params(w_oihw, b, W):
    """Fold a 3x3 conv's horizontal taps + channel mixing into banded
    (W*C, W*C) matrices (one per vertical tap) and a lane-dense bias row.
    Run ONCE at parameter-prep time, not per forward call."""
    Cout, Cin, _, _ = w_oihw.shape
    wk = jnp.transpose(w_oihw, (2, 3, 1, 0))          # (ky, kx, ci, co)
    win = jnp.arange(W)[:, None]
    wout = jnp.arange(W)[None, :]
    kx = win - wout + 1                               # (W, W)
    valid = (kx >= 0) & (kx <= 2)
    blocks = wk[:, jnp.clip(kx, 0, 2)]                # (3, W, W, Cin, Cout)
    blocks = jnp.where(valid[None, :, :, None, None], blocks, 0.0)
    banded = jnp.transpose(blocks, (0, 1, 3, 2, 4)).reshape(3, W * Cin, W * Cout)
    bias_row = jnp.tile(b, W).reshape(1, W * Cout)
    return banded, bias_row


@jax.jit
def residual_conv_block(x_nchw, w1b, b1row, w2b, b2row):
    """x_nchw: (N, C, H, W) f32; w*b: (3, W*C, W*C); b*row: (1, W*C)."""
    N, C, H, W = x_nchw.shape
    WC = W * C
    # NCHW -> (N, H, W*C): channels packed with W onto the lane axis.
    x = jnp.transpose(x_nchw, (0, 2, 3, 1)).reshape(N, H, WC)

    matmul_flops = N * 2 * (3 * 2 * H * WC * WC + 2 * 2 * H * H * WC)
    bytes_accessed = 4 * (2 * N * H * WC + 2 * 3 * WC * WC + 2 * WC)
    cost = pl.CostEstimate(flops=matmul_flops,
                           transcendentals=2 * N * H * W * C,
                           bytes_accessed=bytes_accessed)

    out = pl.pallas_call(
        _residual_conv_block_kernel,
        out_shape=jax.ShapeDtypeStruct((N, H, WC), x.dtype),
        grid_spec=pltpu.PrefetchScalarGridSpec(
            num_scalar_prefetch=0,
            grid=(N,),
            in_specs=[
                pl.BlockSpec((1, H, WC), lambda n: (n, 0, 0)),
                pl.BlockSpec((3, WC, WC), lambda n: (0, 0, 0)),
                pl.BlockSpec((1, WC), lambda n: (0, 0)),
                pl.BlockSpec((3, WC, WC), lambda n: (0, 0, 0)),
                pl.BlockSpec((1, WC), lambda n: (0, 0)),
            ],
            out_specs=pl.BlockSpec((1, H, WC), lambda n: (n, 0, 0)),
        ),
        compiler_params=pltpu.CompilerParams(
            dimension_semantics=("parallel",),
            vmem_limit_bytes=32 * 1024 * 1024),
        cost_estimate=cost,
    )(x, w1b, b1row, w2b, b2row)

    return jnp.transpose(out.reshape(N, H, W, C), (0, 3, 1, 2))   # -> NCHW


def _reference(x_nchw, w1, b1, w2, b2):
    """Pure-JAX reference (lax.conv) mirroring the PyTorch forward."""
    def conv(v, w, b):
        y = lax.conv_general_dilated(
            v, w, window_strides=(1, 1), padding="SAME",
            dimension_numbers=("NCHW", "OIHW", "NCHW"))
        return y + b.reshape(1, -1, 1, 1)

    out = _gelu_exact(x_nchw)
    out = conv(out, w1, b1)
    out = _gelu_exact(out)
    out = conv(out, w2, b2)
    return x_nchw + out


def _init_params(key, channels):
    """Kaiming normal (fan_out, relu) weights; PyTorch default bias init."""
    k1, k2, k3, k4 = jax.random.split(key, 4)
    fan_out = channels * 3 * 3
    fan_in = channels * 3 * 3
    w_std = (2.0 / fan_out) ** 0.5
    b_bound = 1.0 / (fan_in ** 0.5)
    w1 = w_std * jax.random.normal(k1, (channels, channels, 3, 3), jnp.float32)
    w2 = w_std * jax.random.normal(k2, (channels, channels, 3, 3), jnp.float32)
    b1 = jax.random.uniform(k3, (channels,), jnp.float32, -b_bound, b_bound)
    b2 = jax.random.uniform(k4, (channels,), jnp.float32, -b_bound, b_bound)
    return w1, b1, w2, b2


if __name__ == "__main__":
    key = jax.random.PRNGKey(0)
    kx, kp = jax.random.split(key)

    N, C, H, W = 2, 8, 16, 16            # W * C = 128 -> fully lane-dense
    x = jax.random.normal(kx, (N, C, H, W), jnp.float32)
    w1, b1, w2, b2 = _init_params(kp, C)

    # One-time parameter preparation (kept out of the per-call hot path).
    w1b, b1row = _banded_conv_params(w1, b1, W)
    w2b, b2row = _banded_conv_params(w2, b2, W)

    out = residual_conv_block(x, w1b, b1row, w2b, b2row)
    out = jax.block_until_ready(out)

    ref = _reference(x, w1, b1, w2, b2)
    assert out.shape == x.shape and out.dtype == x.dtype
    assert jnp.allclose(out, ref, rtol=2e-4, atol=2e-4), (
        float(jnp.max(jnp.abs(out - ref))))

    print("KERNEL_OK")
</pallas_src>

<mosaic_0001>
module attributes {stable_mosaic.version = 11 : i64} {
  func.func @_residual_conv_block_kernel(%arg0: i32, %arg1: memref<1x16x128xf32, #tpu.memory_space<vmem>>, %arg2: memref<3x128x128xf32, #tpu.memory_space<vmem>>, %arg3: memref<1x128xf32, #tpu.memory_space<vmem>>, %arg4: memref<3x128x128xf32, #tpu.memory_space<vmem>>, %arg5: memref<1x128xf32, #tpu.memory_space<vmem>>, %arg6: memref<1x16x128xf32, #tpu.memory_space<vmem>>) attributes {dimension_semantics = [#tpu.dimension_semantics<parallel>], iteration_bounds = array<i64: 2>, scalar_prefetch = 0 : i64, scratch_operands = 0 : i64, tpu.core_type = #tpu.core_type<tc>, window_params = [{transform_indices = @transform_0, window_bounds = array<i64: 1, 16, 128>}, {pipeline_mode = #tpu.pipeline_mode<synchronous>, transform_indices = @transform_1, window_bounds = array<i64: 3, 128, 128>}, {pipeline_mode = #tpu.pipeline_mode<synchronous>, transform_indices = @transform_2, window_bounds = array<i64: 1, 128>}, {pipeline_mode = #tpu.pipeline_mode<synchronous>, transform_indices = @transform_3, window_bounds = array<i64: 3, 128, 128>}, {pipeline_mode = #tpu.pipeline_mode<synchronous>, transform_indices = @transform_4, window_bounds = array<i64: 1, 128>}, {transform_indices = @transform_5, window_bounds = array<i64: 1, 16, 128>}]} {
    %0 = tpu.iota {dimensions = array<i32: 0>} : vector<16x16xi32>
    %1 = tpu.iota {dimensions = array<i32: 1>} : vector<16x16xi32>
    %c1_i32 = arith.constant 1 : i32
    %2 = vector.broadcast %c1_i32 : i32 to vector<16x16xi32>
    %3 = arith.subi %0, %2 : vector<16x16xi32>
    %4 = arith.cmpi eq, %1, %3 : vector<16x16xi32>
    %5 = arith.extui %4 : vector<16x16xi1> to vector<16x16xi32>
    %6 = arith.sitofp %5 : vector<16x16xi32> to vector<16x16xf32>
    %c1_i32_0 = arith.constant 1 : i32
    %7 = vector.broadcast %c1_i32_0 : i32 to vector<16x16xi32>
    %8 = arith.addi %0, %7 : vector<16x16xi32>
    %9 = arith.cmpi eq, %1, %8 : vector<16x16xi32>
    %10 = arith.extui %9 : vector<16x16xi1> to vector<16x16xi32>
    %11 = arith.sitofp %10 : vector<16x16xi32> to vector<16x16xf32>
    %c0 = arith.constant 0 : index
    %c0_1 = arith.constant 0 : index
    %c0_2 = arith.constant 0 : index
    %12 = vector.load %arg1[%c0, %c0_1, %c0_2] : memref<1x16x128xf32, #tpu.memory_space<vmem>>, vector<1x16x128xf32>
    %13 = vector.shape_cast %12 : vector<1x16x128xf32> to vector<16x128xf32>
    %cst = arith.constant 5.000000e-01 : f32
    %14 = vector.broadcast %cst : f32 to vector<16x128xf32>
    %15 = arith.mulf %14, %13 : vector<16x128xf32>
    %cst_3 = arith.constant 0.707106769 : f32
    %16 = vector.broadcast %cst_3 : f32 to vector<16x128xf32>
    %17 = arith.mulf %13, %16 : vector<16x128xf32>
    %18 = math.erf %17 : vector<16x128xf32>
    %cst_4 = arith.constant 1.000000e+00 : f32
    %19 = vector.broadcast %cst_4 : f32 to vector<16x128xf32>
    %20 = arith.addf %19, %18 : vector<16x128xf32>
    %21 = arith.mulf %15, %20 : vector<16x128xf32>
    %c0_5 = arith.constant 0 : index
    %c0_6 = arith.constant 0 : index
    %c0_7 = arith.constant 0 : index
    %22 = vector.load %arg2[%c0_5, %c0_6, %c0_7] : memref<3x128x128xf32, #tpu.memory_space<vmem>>, vector<1x128x128xf32>
    %23 = vector.shape_cast %22 : vector<1x128x128xf32> to vector<128x128xf32>
    %cst_8 = arith.constant dense<0.000000e+00> : vector<16x128xf32>
    %24 = tpu.matmul %21, %23, %cst_8 {dimension_numbers = #tpu.dot_dimension_numbers<[1], [0], [0], [1], [0, 0, 1, 1], [], []>} : vector<16x128xf32>, vector<128x128xf32>, vector<16x128xf32> -> vector<16x128xf32>
    %c1 = arith.constant 1 : index
    %c0_9 = arith.constant 0 : index
    %c0_10 = arith.constant 0 : index
    %25 = vector.load %arg2[%c1, %c0_9, %c0_10] : memref<3x128x128xf32, #tpu.memory_space<vmem>>, vector<1x128x128xf32>
    %26 = vector.shape_cast %25 : vector<1x128x128xf32> to vector<128x128xf32>
    %cst_11 = arith.constant dense<0.000000e+00> : vector<16x128xf32>
    %27 = tpu.matmul %21, %26, %cst_11 {dimension_numbers = #tpu.dot_dimension_numbers<[1], [0], [0], [1], [0, 0, 1, 1], [], []>} : vector<16x128xf32>, vector<128x128xf32>, vector<16x128xf32> -> vector<16x128xf32>
    %c2 = arith.constant 2 : index
    %c0_12 = arith.constant 0 : index
    %c0_13 = arith.constant 0 : index
    %28 = vector.load %arg2[%c2, %c0_12, %c0_13] : memref<3x128x128xf32, #tpu.memory_space<vmem>>, vector<1x128x128xf32>
    %29 = vector.shape_cast %28 : vector<1x128x128xf32> to vector<128x128xf32>
    %cst_14 = arith.constant dense<0.000000e+00> : vector<16x128xf32>
    %30 = tpu.matmul %21, %29, %cst_14 {dimension_numbers = #tpu.dot_dimension_numbers<[1], [0], [0], [1], [0, 0, 1, 1], [], []>} : vector<16x128xf32>, vector<128x128xf32>, vector<16x128xf32> -> vector<16x128xf32>
    %cst_15 = arith.constant dense<0.000000e+00> : vector<16x128xf32>
    %31 = tpu.matmul %6, %24, %cst_15 {dimension_numbers = #tpu.dot_dimension_numbers<[1], [0], [0], [1], [0, 0, 1, 1], [], []>} : vector<16x16xf32>, vector<16x128xf32>, vector<16x128xf32> -> vector<16x128xf32>
    %32 = arith.addf %31, %27 : vector<16x128xf32>
    %cst_16 = arith.constant dense<0.000000e+00> : vector<16x128xf32>
    %33 = tpu.matmul %11, %30, %cst_16 {dimension_numbers = #tpu.dot_dimension_numbers<[1], [0], [0], [1], [0, 0, 1, 1], [], []>} : vector<16x16xf32>, vector<16x128xf32>, vector<16x128xf32> -> vector<16x128xf32>
    %34 = arith.addf %32, %33 : vector<16x128xf32>
    %c0_17 = arith.constant 0 : index
    %c0_18 = arith.constant 0 : index
    %35 = vector.load %arg3[%c0_17, %c0_18] : memref<1x128xf32, #tpu.memory_space<vmem>>, vector<1x128xf32>
    %36 = vector.broadcast %35 : vector<1x128xf32> to vector<16x128xf32>
    %37 = arith.addf %34, %36 : vector<16x128xf32>
    %cst_19 = arith.constant 5.000000e-01 : f32
    %38 = vector.broadcast %cst_19 : f32 to vector<16x128xf32>
    %39 = arith.mulf %38, %37 : vector<16x128xf32>
    %cst_20 = arith.constant 0.707106769 : f32
    %40 = vector.broadcast %cst_20 : f32 to vector<16x128xf32>
    %41 = arith.mulf %37, %40 : vector<16x128xf32>
    %42 = math.erf %41 : vector<16x128xf32>
    %cst_21 = arith.constant 1.000000e+00 : f32
    %43 = vector.broadcast %cst_21 : f32 to vector<16x128xf32>
    %44 = arith.addf %43, %42 : vector<16x128xf32>
    %45 = arith.mulf %39, %44 : vector<16x128xf32>
    %c0_22 = arith.constant 0 : index
    %c0_23 = arith.constant 0 : index
    %c0_24 = arith.constant 0 : index
    %46 = vector.load %arg4[%c0_22, %c0_23, %c0_24] : memref<3x128x128xf32, #tpu.memory_space<vmem>>, vector<1x128x128xf32>
    %47 = vector.shape_cast %46 : vector<1x128x128xf32> to vector<128x128xf32>
    %cst_25 = arith.constant dense<0.000000e+00> : vector<16x128xf32>
    %48 = tpu.matmul %45, %47, %cst_25 {dimension_numbers = #tpu.dot_dimension_numbers<[1], [0], [0], [1], [0, 0, 1, 1], [], []>} : vector<16x128xf32>, vector<128x128xf32>, vector<16x128xf32> -> vector<16x128xf32>
    %c1_26 = arith.constant 1 : index
    %c0_27 = arith.constant 0 : index
    %c0_28 = arith.constant 0 : index
    %49 = vector.load %arg4[%c1_26, %c0_27, %c0_28] : memref<3x128x128xf32, #tpu.memory_space<vmem>>, vector<1x128x128xf32>
    %50 = vector.shape_cast %49 : vector<1x128x128xf32> to vector<128x128xf32>
    %cst_29 = arith.constant dense<0.000000e+00> : vector<16x128xf32>
    %51 = tpu.matmul %45, %50, %cst_29 {dimension_numbers = #tpu.dot_dimension_numbers<[1], [0], [0], [1], [0, 0, 1, 1], [], []>} : vector<16x128xf32>, vector<128x128xf32>, vector<16x128xf32> -> vector<16x128xf32>
    %c2_30 = arith.constant 2 : index
    %c0_31 = arith.constant 0 : index
    %c0_32 = arith.constant 0 : index
    %52 = vector.load %arg4[%c2_30, %c0_31, %c0_32] : memref<3x128x128xf32, #tpu.memory_space<vmem>>, vector<1x128x128xf32>
    %53 = vector.shape_cast %52 : vector<1x128x128xf32> to vector<128x128xf32>
    %cst_33 = arith.constant dense<0.000000e+00> : vector<16x128xf32>
    %54 = tpu.matmul %45, %53, %cst_33 {dimension_numbers = #tpu.dot_dimension_numbers<[1], [0], [0], [1], [0, 0, 1, 1], [], []>} : vector<16x128xf32>, vector<128x128xf32>, vector<16x128xf32> -> vector<16x128xf32>
    %cst_34 = arith.constant dense<0.000000e+00> : vector<16x128xf32>
    %55 = tpu.matmul %6, %48, %cst_34 {dimension_numbers = #tpu.dot_dimension_numbers<[1], [0], [0], [1], [0, 0, 1, 1], [], []>} : vector<16x16xf32>, vector<16x128xf32>, vector<16x128xf32> -> vector<16x128xf32>
    %56 = arith.addf %55, %51 : vector<16x128xf32>
    %cst_35 = arith.constant dense<0.000000e+00> : vector<16x128xf32>
    %57 = tpu.matmul %11, %54, %cst_35 {dimension_numbers = #tpu.dot_dimension_numbers<[1], [0], [0], [1], [0, 0, 1, 1], [], []>} : vector<16x16xf32>, vector<16x128xf32>, vector<16x128xf32> -> vector<16x128xf32>
    %58 = arith.addf %56, %57 : vector<16x128xf32>
    %c0_36 = arith.constant 0 : index
    %c0_37 = arith.constant 0 : index
    %59 = vector.load %arg5[%c0_36, %c0_37] : memref<1x128xf32, #tpu.memory_space<vmem>>, vector<1x128xf32>
    %60 = vector.broadcast %59 : vector<1x128xf32> to vector<16x128xf32>
    %61 = arith.addf %58, %60 : vector<16x128xf32>
    %62 = arith.addf %13, %61 : vector<16x128xf32>
    %c0_38 = arith.constant 0 : index
    %c0_39 = arith.constant 0 : index
    %c0_40 = arith.constant 0 : index
    %63 = vector.load %arg6[%c0_38, %c0_39, %c0_40] : memref<1x16x128xf32, #tpu.memory_space<vmem>>, vector<1x16x128xf32>
    %64 = vector.shape_cast %63 : vector<1x16x128xf32> to vector<16x128xf32>
    %65 = vector.shape_cast %62 : vector<16x128xf32> to vector<1x16x128xf32>
    tpu.vector_store %arg6[%c0_38, %c0_39, %c0_40], %65 {strides = array<i32>} : memref<1x16x128xf32, #tpu.memory_space<vmem>>, vector<1x16x128xf32>,
    return
  }
  func.func @transform_0(%arg0: i32) -> (i32, i32, i32) {
    %c0_i32 = arith.constant 0 : i32
    %c0_i32_0 = arith.constant 0 : i32
    %c0_i32_1 = arith.constant 0 : i32
    return %arg0, %c0_i32, %c0_i32_0 : i32, i32, i32
  }
  func.func @transform_1(%arg0: i32) -> (i32, i32, i32) {
    %c0_i32 = arith.constant 0 : i32
    %c0_i32_0 = arith.constant 0 : i32
    %c0_i32_1 = arith.constant 0 : i32
    %c0_i32_2 = arith.constant 0 : i32
    return %c0_i32, %c0_i32_0, %c0_i32_1 : i32, i32, i32
  }
  func.func @transform_2(%arg0: i32) -> (i32, i32) {
    %c0_i32 = arith.constant 0 : i32
    %c0_i32_0 = arith.constant 0 : i32
    %c0_i32_1 = arith.constant 0 : i32
    return %c0_i32, %c0_i32_0 : i32, i32
  }
  func.func @transform_3(%arg0: i32) -> (i32, i32, i32) {
    %c0_i32 = arith.constant 0 : i32
    %c0_i32_0 = arith.constant 0 : i32
    %c0_i32_1 = arith.constant 0 : i32
    %c0_i32_2 = arith.constant 0 : i32
    return %c0_i32, %c0_i32_0, %c0_i32_1 : i32, i32, i32
  }
  func.func @transform_4(%arg0: i32) -> (i32, i32) {
    %c0_i32 = arith.constant 0 : i32
    %c0_i32_0 = arith.constant 0 : i32
    %c0_i32_1 = arith.constant 0 : i32
    return %c0_i32, %c0_i32_0 : i32, i32
  }
  func.func @transform_5(%arg0: i32) -> (i32, i32, i32) {
    %c0_i32 = arith.constant 0 : i32
    %c0_i32_0 = arith.constant 0 : i32
    %c0_i32_1 = arith.constant 0 : i32
    return %arg0, %c0_i32, %c0_i32_0 : i32, i32, i32
  }
}

</mosaic_0001>

<llo_original>
// kernel: residual_conv_block.1
$region0: #{residual_conv_block.1}
  #allocation0 [shape = 'u32[]', space=smem, size = 0x4, offset = 0x4, fixed_abs, tag = 'smem constant byte address 0x4 - core index']
  #allocation1 [shape = 'u32[72,128]{1,0:T(1,128)}', space=vmem, size = 0x9000, scoped, tag = 'internal scratch']
  %s0 = inlined_call_operand.vmem [shape: f32[2,16,128], index: 0, kind: input, shape index: {}]
  %s1 = inlined_call_operand.vmem [shape: f32[3,128,128], index: 1, kind: input, shape index: {}]
  %s2 = inlined_call_operand.vmem [shape: f32[1,128], index: 2, kind: input, shape index: {}]
  %s3 = inlined_call_operand.vmem [shape: f32[3,128,128], index: 3, kind: input, shape index: {}]
  %s4 = inlined_call_operand.vmem [shape: f32[1,128], index: 4, kind: input, shape index: {}]
  %s5 = inlined_call_operand.vmem [shape: f32[2,16,128], index: 5, kind: output, shape index: {}]
  %s6 = sld [smem:[#allocation0]]
  $region53: #{residual_conv_block.1} parent=0
    _
  %s8 = ssub.s32 1, %s6
  %s9 = scalar_select 0, %s8, %s6
  loop: start=0, step=1, limit=4
  $region2: #{residual_conv_block.1} parent=0 // loop_pre_header
    _
  $region3: #{residual_conv_block.1} parent=0 // loop_header
    %s11 = sphi 0, %s15
    %p12 = scmp.ge.s32.totalorder %s11, 4
    %s21 = sphi 0, %s23
    %s24 = sphi 0, %s21
    %s25 = sphi 0, %s24
    %s41 = sphi 0, %s25
    %s45 = sphi 0, %s45
    %s47 = sphi 0, %s45
    %s48 = sphi 0, %s47
    %s62 = sphi 0, %s48
    %s66 = sphi 0, %s66
    %s68 = sphi 0, %s66
    %s69 = sphi 0, %s68
    %s83 = sphi 0, %s69
    %s87 = sphi 0, %s87
    %s89 = sphi 0, %s87
    %s90 = sphi 0, %s89
    %s104 = sphi 0, %s90
    %s108 = sphi 0, %s108
    %s110 = sphi 0, %s108
    %s111 = sphi 0, %s110
    %s125 = sphi 0, %s111
    %s131 = sphi 0, %s133
    %s134 = sphi 0, %s131
    %s135 = sphi 0, %s134
    %s151 = sphi 0, %s135
  $region4: #{residual_conv_block.1} parent=0 // loop_header_branch
    %14 = sbr.rel (%p12) target = $region8
  $region5: #{residual_conv_block.1} parent=0 // loop_body
    %s16 = ssub.s32 %s11, 1
    %s17 = ssub.s32 %s11, 2
    %s18 = sadd.s32 %s11, 1
    %s19 = ssub.s32 %s11, %s18
    %p20 = scmp.eq.s32.totalorder %s19, 0
    %s22 = sadd.s32 %s21, 1
    %s23 = scalar_select %p20, %s21, %s22
    %p26 = pneg %p20
    %p27 = scmp.eq.s32.totalorder %s11, 1
    %p28 = por %p26, %p27
    %p29 = scmp.ne.s32.totalorder %s21, %s24
    %p30 = scmp.eq.s32.totalorder %s11, 0
    %p31 = por %p29, %p30
    %p32 = scmp.ne.s32.totalorder %s21, %s24
    %p33 = scmp.eq.s32.totalorder %s16, 1
    %p34 = por %p32, %p33
    %p35 = scmp.ne.s32.totalorder %s24, %s25
    %p36 = scmp.eq.s32.totalorder %s16, 0
    %p37 = por %p35, %p36
    %p38 = scmp.ne.s32.totalorder %s24, %s25
    %p39 = scmp.eq.s32.totalorder %s17, 1
    %p40 = por %p38, %p39
    %p42 = scmp.ne.s32.totalorder %s25, %s41
    %p43 = scmp.eq.s32.totalorder %s17, 0
    %p44 = por %p42, %p43
    %s46 = sadd.s32 %s45, 1
    %p49 = scmp.eq.s32.totalorder %s11, 1
    %p50 = scmp.ne.s32.totalorder %s45, %s47
    %p51 = scmp.eq.s32.totalorder %s11, 0
    %p52 = por %p50, %p51
    %p53 = scmp.ne.s32.totalorder %s45, %s47
    %p54 = scmp.eq.s32.totalorder %s16, 1
    %p55 = por %p53, %p54
    %p56 = scmp.ne.s32.totalorder %s47, %s48
    %p57 = scmp.eq.s32.totalorder %s16, 0
    %p58 = por %p56, %p57
    %p59 = scmp.ne.s32.totalorder %s47, %s48
    %p60 = scmp.eq.s32.totalorder %s17, 1
    %p61 = por %p59, %p60
    %p63 = scmp.ne.s32.totalorder %s48, %s62
    %p64 = scmp.eq.s32.totalorder %s17, 0
    %p65 = por %p63, %p64
    %s67 = sadd.s32 %s66, 1
    %p70 = scmp.eq.s32.totalorder %s11, 1
    %p71 = scmp.ne.s32.totalorder %s66, %s68
    %p72 = scmp.eq.s32.totalorder %s11, 0
    %p73 = por %p71, %p72
    %p74 = scmp.ne.s32.totalorder %s66, %s68
    %p75 = scmp.eq.s32.totalorder %s16, 1
    %p76 = por %p74, %p75
    %p77 = scmp.ne.s32.totalorder %s68, %s69
    %p78 = scmp.eq.s32.totalorder %s16, 0
    %p79 = por %p77, %p78
    %p80 = scmp.ne.s32.totalorder %s68, %s69
    %p81 = scmp.eq.s32.totalorder %s17, 1
    %p82 = por %p80, %p81
    %p84 = scmp.ne.s32.totalorder %s69, %s83
    %p85 = scmp.eq.s32.totalorder %s17, 0
    %p86 = por %p84, %p85
    %s88 = sadd.s32 %s87, 1
    %p91 = scmp.eq.s32.totalorder %s11, 1
    %p92 = scmp.ne.s32.totalorder %s87, %s89
    %p93 = scmp.eq.s32.totalorder %s11, 0
    %p94 = por %p92, %p93
    %p95 = scmp.ne.s32.totalorder %s87, %s89
    %p96 = scmp.eq.s32.totalorder %s16, 1
    %p97 = por %p95, %p96
    %p98 = scmp.ne.s32.totalorder %s89, %s90
    %p99 = scmp.eq.s32.totalorder %s16, 0
    %p100 = por %p98, %p99
    %p101 = scmp.ne.s32.totalorder %s89, %s90
    %p102 = scmp.eq.s32.totalorder %s17, 1
    %p103 = por %p101, %p102
    %p105 = scmp.ne.s32.totalorder %s90, %s104
    %p106 = scmp.eq.s32.totalorder %s17, 0
    %p107 = por %p105, %p106
    %s109 = sadd.s32 %s108, 1
    %p112 = scmp.eq.s32.totalorder %s11, 1
    %p113 = scmp.ne.s32.totalorder %s108, %s110
    %p114 = scmp.eq.s32.totalorder %s11, 0
    %p115 = por %p113, %p114
    %p116 = scmp.ne.s32.totalorder %s108, %s110
    %p117 = scmp.eq.s32.totalorder %s16, 1
    %p118 = por %p116, %p117
    %p119 = scmp.ne.s32.totalorder %s110, %s111
    %p120 = scmp.eq.s32.totalorder %s16, 0
    %p121 = por %p119, %p120
    %p122 = scmp.ne.s32.totalorder %s110, %s111
    %p123 = scmp.eq.s32.totalorder %s17, 1
    %p124 = por %p122, %p123
    %p126 = scmp.ne.s32.totalorder %s111, %s125
    %p127 = scmp.eq.s32.totalorder %s17, 0
    %p128 = por %p126, %p127
    %s129 = ssub.s32 %s11, %s18
    %p130 = scmp.eq.s32.totalorder %s129, 0
    %s132 = sadd.s32 %s131, 1
    %s133 = scalar_select %p130, %s131, %s132
    %p136 = pneg %p130
    %p137 = scmp.eq.s32.totalorder %s11, 1
    %p138 = por %p136, %p137
    %p139 = scmp.ne.s32.totalorder %s131, %s134
    %p140 = scmp.eq.s32.totalorder %s11, 0
    %p141 = por %p139, %p140
    %p142 = scmp.ne.s32.totalorder %s131, %s134
    %p143 = scmp.eq.s32.totalorder %s16, 1
    %p144 = por %p142, %p143
    %p145 = scmp.ne.s32.totalorder %s134, %s135
    %p146 = scmp.eq.s32.totalorder %s16, 0
    %p147 = por %p145, %p146
    %p148 = scmp.ne.s32.totalorder %s134, %s135
    %p149 = scmp.eq.s32.totalorder %s17, 1
    %p150 = por %p148, %p149
    %p152 = scmp.ne.s32.totalorder %s135, %s151
    %p153 = scmp.eq.s32.totalorder %s17, 0
    %p154 = por %p152, %p153
    %p155 = scmp.le.s32.totalorder 1, %s11
    %p156 = scmp.lt.s32.totalorder %s11, 3
    %p157 = pnand %p155, %p156
    %p158 = pneg %p157
    // Predicated region
    $region9: #{residual_conv_block.1} parent=5 // pred_check
      _
    $region10: #{residual_conv_block.1} parent=5 // pred_check_branch
      %160 = sbr.rel (%p157) target = $region12
    $region11: #{residual_conv_block.1} parent=5 // pred_region
      %s161 = ssub.s32 %s11, 1
      // Predicated region
      $region13: #{residual_conv_block.1} parent=11 // pred_check
        %p162 = pneg %p58
      $region14: #{residual_conv_block.1} parent=11 // pred_check_branch
        %164 = sbr.rel (%p162) target = $region16
      $region15: #{residual_conv_block.1} parent=11 // pred_region
        _
      $region16: #{residual_conv_block.1} parent=11 // pred_fallthru
        _
      // Predicated region
      $region17: #{residual_conv_block.1} parent=11 // pred_check
        %p165 = pneg %p79
      $region18: #{residual_conv_block.1} parent=11 // pred_check_branch
        %167 = sbr.rel (%p165) target = $region20
      $region19: #{residual_conv_block.1} parent=11 // pred_region
        _
      $region20: #{residual_conv_block.1} parent=11 // pred_fallthru
        _
      // Predicated region
      $region21: #{residual_conv_block.1} parent=11 // pred_check
        %p168 = pneg %p100
      $region22: #{residual_conv_block.1} parent=11 // pred_check_branch
        %170 = sbr.rel (%p168) target = $region24
      $region23: #{residual_conv_block.1} parent=11 // pred_region
        _
      $region24: #{residual_conv_block.1} parent=11 // pred_fallthru
        _
      // Predicated region
      $region25: #{residual_conv_block.1} parent=11 // pred_check
        %p171 = pneg %p121
      $region26: #{residual_conv_block.1} parent=11 // pred_check_branch
        %173 = sbr.rel (%p171) target = $region28
      $region27: #{residual_conv_block.1} parent=11 // pred_region
        _
      $region28: #{residual_conv_block.1} parent=11 // pred_fallthru
        _
    $region12: #{residual_conv_block.1} parent=5 // pred_fallthru
      _
    %p174 = scmp.lt.s32.totalorder %s11, 2
    // Predicated region
    $region29: #{residual_conv_block.1} parent=5 // pred_check
      %p175 = pneg %p174
    $region30: #{residual_conv_block.1} parent=5 // pred_check_branch
      %177 = sbr.rel (%p175) target = $region32
    $region31: #{residual_conv_block.1} parent=5 // pred_region
      // Predicated region
      $region33: #{residual_conv_block.1} parent=31 // pred_check
        %p178 = pneg %p31
      $region34: #{residual_conv_block.1} parent=31 // pred_check_branch
        %180 = sbr.rel (%p178) target = $region36
      $region35: #{residual_conv_block.1} parent=31 // pred_region
        %p181 = scmp.lt.s32.totalorder %s11, 1
        %s182 = scalar_select %p181, %s11, 1
        %s183 = smul.addr %s182, 2
        %s184 = smul.addr %s183, 8
        %s185 = scalar_lea.vmem %s0, %s184
      $region36: #{residual_conv_block.1} parent=31 // pred_fallthru
        _
    $region32: #{residual_conv_block.1} parent=5 // pred_fallthru
      _
    %p186 = scmp.le.s32.totalorder 1, %s11
    %p187 = scmp.lt.s32.totalorder %s11, 3
    %p188 = pnand %p186, %p187
    %p189 = pneg %p188
    // Predicated region
    $region37: #{residual_conv_block.1} parent=5 // pred_check
      _
    $region38: #{residual_conv_block.1} parent=5 // pred_check_branch
      %191 = sbr.rel (%p188) target = $region40
    $region39: #{residual_conv_block.1} parent=5 // pred_region
      %s192 = ssub.s32 %s11, 1
      %p193 = scmp.lt.s32.totalorder %s16, 1
      %s194 = scalar_select %p193, %s16, 1
      %s195 = smul.addr %s194, 2
      %s196 = smul.addr %s195, 8
      %s197 = scalar_lea.vmem %s0, %s196
      %p198 = pneg %p37
      %p199 = pneg %p34
      %p200 = pneg %p58
      %p201 = pneg %p55
      %p202 = pneg %p79
      %p203 = pneg %p76
      %p204 = pneg %p100
      %p205 = pneg %p97
      %p206 = pneg %p121
      %p207 = pneg %p118
      %p208 = pneg %p147
      %p209 = pneg %p144
      %p210 = scmp.lt.s32.totalorder %s16, 1
      %s211 = scalar_select %p210, %s16, 1
      %s212 = smul.addr %s211, 2
      %s213 = smul.addr %s212, 8
      %s214 = scalar_lea.vmem %s5, %s213
      %p215 = scmp.lt.s32.totalorder %s16, 1
      %s216 = scalar_select %p215, %s16, 1
      %s217 = smul.addr %s216, 2
      %s218 = smul.addr %s217, 8
      %s219 = scalar_lea.vmem %s0, %s218
      %p220 = scmp.lt.s32.totalorder %s16, 1
      %s221 = scalar_select %p220, %s16, 1
      %s222 = smul.addr %s221, 2
      %s223 = smul.addr %s222, 8
      %s224 = scalar_lea.vmem %s5, %s223
      %v225 = vlaneseq
      %v226 = vshrl.u32 %v225, 7
      %v227 = vadd.s32 %v226, 8
      %v228 = vlaneseq
      %v229 = vand.u32 %v228, 127
      %v230 = vsub.s32 %v226, 1
      %v231 = vsub.s32 %v227, 1
      %vm232 = vcmp.eq.s32.totalorder %v229, %v230
      %vm233 = vcmp.eq.s32.totalorder %v229, %v231
      %v234 = vsel %vm232, 1, 0
      %v235 = vsel %vm233, 1, 0
      %v236 = vcvt.s32.f32 %v234
      %v237 = vcvt.s32.f32 %v235
      %v238 = vadd.s32 %v226, 1
      %v239 = vadd.s32 %v227, 1
      %vm240 = vcmp.eq.s32.totalorder %v229, %v238
      %vm241 = vcmp.eq.s32.totalorder %v229, %v239
      %v242 = vsel %vm240, 1, 0
      %v243 = vsel %vm241, 1, 0
      %v244 = vcvt.s32.f32 %v242
      %v245 = vcvt.s32.f32 %v243
      %v246 = vld [vmem:[%s219] sm:$0xff]
      %v247 = vld [vmem:[%s219 + $0x8] sm:$0xff]
      %v248 = vmul.f32 %v246, 0.5
      %v249 = vmul.f32 %v247, 0.5
      %v250 = vmul.f32 %v246, 0.70710677
      %v251 = vmul.f32 %v247, 0.70710677
      %v252 = vmul.f32 %v250, %v250
      %v253 = vmin.f32 16.0, %v252
      %v254 = vmul.f32 %v253, 2.1237322e-06
      %v255 = vadd.f32 %v254, 0.00028619796
      %v256 = vmul.f32 %v253, %v255
      %v257 = vadd.f32 %v256, 0.0036580483
      %v258 = vmul.f32 %v253, %v257
      %v259 = vadd.f32 %v258, 0.05243302
      %v260 = vmul.f32 %v253, %v259
      %v261 = vadd.f32 %v260, 0.18741608
      %v262 = vmul.f32 %v253, %v261
      %v263 = vadd.f32 %v262, 1.1283791
      %v264 = vmul.f32 %v250, %v263
      %v265 = vmul.f32 %v253, 3.8918573e-05
      %v266 = vadd.f32 %v265, 0.001143296
      %v267 = vmul.f32 %v253, %v266
      %v268 = vadd.f32 %v267, 0.014752088
      %v269 = vmul.f32 %v253, %v268
      %v270 = vadd.f32 %v269, 0.112945676
      %v271 = vmul.f32 %v253, %v270
      %v272 = vadd.f32 %v271, 0.4994258
      %v273 = vmul.f32 %v253, %v272
      %v274 = vadd.f32 %v273, 1.0
      %v275 = vrcp.pop %v274
      %v276 = vmul.f32 %v274, %v275
      %v277 = vsub.f32 1.0, %v276
      %v278 = vmul.f32 %v275, %v277
      %v279 = vadd.f32 %v275, %v278
      %vm280 = vweird.f32 %v274
      %vm281 = vweird.f32 %v275
      %vm282 = vmor %vm280, %vm281
      %v283 = vsel %vm282, %v275, %v279
      %v284 = vand.u32 2147483647, %v274
      %vm285 = vcmp.eq.f32.partialorder %v284, 8.507059e+37
      %v286 = vand.u32 %v274, 2147483648
      %v287 = vor.u32 1.1754944e-38, %v286
      %v288 = vsel %vm285, %v287, %v283
      %v289 = vmul.f32 %v264, %v288
      %v290 = vmin.f32 %v289, 1.0
      %v291 = vmax.f32 %v290, -1.0
      %v292 = vmul.f32 %v251, %v251
      %v293 = vmin.f32 16.0, %v292
      %v294 = vmul.f32 %v293, 2.1237322e-06
      %v295 = vadd.f32 %v294, 0.00028619796
      %v296 = vmul.f32 %v293, %v295
      %v297 = vadd.f32 %v296, 0.0036580483
      %v298 = vmul.f32 %v293, %v297
      %v299 = vadd.f32 %v298, 0.05243302
      %v300 = vmul.f32 %v293, %v299
      %v301 = vadd.f32 %v300, 0.18741608
      %v302 = vmul.f32 %v293, %v301
      %v303 = vadd.f32 %v302, 1.1283791
      %v304 = vmul.f32 %v251, %v303
      %v305 = vmul.f32 %v293, 3.8918573e-05
      %v306 = vadd.f32 %v305, 0.001143296
      %v307 = vmul.f32 %v293, %v306
      %v308 = vadd.f32 %v307, 0.014752088
      %v309 = vmul.f32 %v293, %v308
      %v310 = vadd.f32 %v309, 0.112945676
      %v311 = vmul.f32 %v293, %v310
      %v312 = vadd.f32 %v311, 0.4994258
      %v313 = vmul.f32 %v293, %v312
      %v314 = vadd.f32 %v313, 1.0
      %v315 = vrcp.pop %v314
      %v316 = vmul.f32 %v314, %v315
      %v317 = vsub.f32 1.0, %v316
      %v318 = vmul.f32 %v315, %v317
      %v319 = vadd.f32 %v315, %v318
      %vm320 = vweird.f32 %v314
      %vm321 = vweird.f32 %v315
      %vm322 = vmor %vm320, %vm321
      %v323 = vsel %vm322, %v315, %v319
      %v324 = vand.u32 2147483647, %v314
      %vm325 = vcmp.eq.f32.partialorder %v324, 8.507059e+37
      %v326 = vand.u32 %v314, 2147483648
      %v327 = vor.u32 1.1754944e-38, %v326
      %v328 = vsel %vm325, %v327, %v323
      %v329 = vmul.f32 %v304, %v328
      %v330 = vmin.f32 %v329, 1.0
      %v331 = vmax.f32 %v330, -1.0
      %v332 = vadd.f32 %v291, 1.0
      %v333 = vadd.f32 %v331, 1.0
      %v334 = vmul.f32 %v248, %v332
      %v335 = vmul.f32 %v249, %v333
      %v336 = vld [vmem:[%s1] sm:$0xff]
      %v337 = vld [vmem:[%s1 + $0x8] sm:$0xff]
      %v338 = vld [vmem:[%s1 + $0x10] sm:$0xff]
      %v339 = vld [vmem:[%s1 + $0x18] sm:$0xff]
      %v340 = vld [vmem:[%s1 + $0x20] sm:$0xff]
      %v341 = vld [vmem:[%s1 + $0x28] sm:$0xff]
      %v342 = vld [vmem:[%s1 + $0x30] sm:$0xff]
      %v343 = vld [vmem:[%s1 + $0x38] sm:$0xff]
      %v344 = vld [vmem:[%s1 + $0x40] sm:$0xff]
      %v345 = vld [vmem:[%s1 + $0x48] sm:$0xff]
      %v346 = vld [vmem:[%s1 + $0x50] sm:$0xff]
      %v347 = vld [vmem:[%s1 + $0x58] sm:$0xff]
      %v348 = vld [vmem:[%s1 + $0x60] sm:$0xff]
      %v349 = vld [vmem:[%s1 + $0x68] sm:$0xff]
      %v350 = vld [vmem:[%s1 + $0x70] sm:$0xff]
      %v351 = vld [vmem:[%s1 + $0x78] sm:$0xff]
      %352 = vmatpush.msra.mxu0 %v351
      %353 = vmatpush.msra.mxu0 %v350
      %354 = vmatpush.msra.mxu0 %v349
      %355 = vmatpush.msra.mxu0 %v348
      %356 = vmatpush.msra.mxu0 %v347
      %357 = vmatpush.msra.mxu0 %v346
      %358 = vmatpush.msra.mxu0 %v345
      %359 = vmatpush.msra.mxu0 %v344
      %360 = vmatpush.msra.mxu0 %v343
      %361 = vmatpush.msra.mxu0 %v342
      %362 = vmatpush.msra.mxu0 %v341
      %363 = vmatpush.msra.mxu0 %v340
      %364 = vmatpush.msra.mxu0 %v339
      %365 = vmatpush.msra.mxu0 %v338
      %366 = vmatpush.msra.mxu0 %v337
      %367 = vmatpush.msra.mxu0 %v336
      %368 = vmatmul.f32.gmra.mxu0 %v334
      %v369 = vpop.f32.mrf.mxu0
      %v370 = vadd.f32 0.0, %v369
      %371 = vmatmul.f32.gmra.mxu0 %v335
      %v372 = vpop.f32.mrf.mxu0
      %v373 = vadd.f32 0.0, %v372
      %374 = vdwg.mxu0
      %s375 = scalar_lea.vmem %s1, 128
      %v376 = vld [vmem:[%s375] sm:$0xff]
      %v377 = vld [vmem:[%s375 + $0x8] sm:$0xff]
      %v378 = vld [vmem:[%s375 + $0x10] sm:$0xff]
      %v379 = vld [vmem:[%s375 + $0x18] sm:$0xff]
      %v380 = vld [vmem:[%s375 + $0x20] sm:$0xff]
      %v381 = vld [vmem:[%s375 + $0x28] sm:$0xff]
      %v382 = vld [vmem:[%s375 + $0x30] sm:$0xff]
      %v383 = vld [vmem:[%s375 + $0x38] sm:$0xff]
      %v384 = vld [vmem:[%s375 + $0x40] sm:$0xff]
      %v385 = vld [vmem:[%s375 + $0x48] sm:$0xff]
      %v386 = vld [vmem:[%s375 + $0x50] sm:$0xff]
      %v387 = vld [vmem:[%s375 + $0x58] sm:$0xff]
      %v388 = vld [vmem:[%s375 + $0x60] sm:$0xff]
      %v389 = vld [vmem:[%s375 + $0x68] sm:$0xff]
      %v390 = vld [vmem:[%s375 + $0x70] sm:$0xff]
      %v391 = vld [vmem:[%s375 + $0x78] sm:$0xff]
      %392 = vmatpush.msra.mxu0 %v391
      %393 = vmatpush.msra.mxu0 %v390
      %394 = vmatpush.msra.mxu0 %v389
      %395 = vmatpush.msra.mxu0 %v388
      %396 = vmatpush.msra.mxu0 %v387
      %397 = vmatpush.msra.mxu0 %v386
      %398 = vmatpush.msra.mxu0 %v385
      %399 = vmatpush.msra.mxu0 %v384
      %400 = vmatpush.msra.mxu0 %v383
      %401 = vmatpush.msra.mxu0 %v382
      %402 = vmatpush.msra.mxu0 %v381
      %403 = vmatpush.msra.mxu0 %v380
      %404 = vmatpush.msra.mxu0 %v379
      %405 = vmatpush.msra.mxu0 %v378
      %406 = vmatpush.msra.mxu0 %v377
      %407 = vmatpush.msra.mxu0 %v376
      %408 = vmatmul.f32.gmra.mxu0 %v334
      %v409 = vpop.f32.mrf.mxu0
      %v410 = vadd.f32 0.0, %v409
      %411 = vmatmul.f32.gmra.mxu0 %v335
      %v412 = vpop.f32.mrf.mxu0
      %v413 = vadd.f32 0.0, %v412
      %414 = vdwg.mxu0
      %s415 = scalar_lea.vmem %s1, 256
      %v416 = vld [vmem:[%s415] sm:$0xff]
      %v417 = vld [vmem:[%s415 + $0x8] sm:$0xff]
      %v418 = vld [vmem:[%s415 + $0x10] sm:$0xff]
      %v419 = vld [vmem:[%s415 + $0x18] sm:$0xff]
      %v420 = vld [vmem:[%s415 + $0x20] sm:$0xff]
      %v421 = vld [vmem:[%s415 + $0x28] sm:$0xff]
      %v422 = vld [vmem:[%s415 + $0x30] sm:$0xff]
      %v423 = vld [vmem:[%s415 + $0x38] sm:$0xff]
      %v424 = vld [vmem:[%s415 + $0x40] sm:$0xff]
      %v425 = vld [vmem:[%s415 + $0x48] sm:$0xff]
      %v426 = vld [vmem:[%s415 + $0x50] sm:$0xff]
      %v427 = vld [vmem:[%s415 + $0x58] sm:$0xff]
      %v428 = vld [vmem:[%s415 + $0x60] sm:$0xff]
      %v429 = vld [vmem:[%s415 + $0x68] sm:$0xff]
      %v430 = vld [vmem:[%s415 + $0x70] sm:$0xff]
      %v431 = vld [vmem:[%s415 + $0x78] sm:$0xff]
      %432 = vmatpush.msra.mxu0 %v431
      %433 = vmatpush.msra.mxu0 %v430
      %434 = vmatpush.msra.mxu0 %v429
      %435 = vmatpush.msra.mxu0 %v428
      %436 = vmatpush.msra.mxu0 %v427
      %437 = vmatpush.msra.mxu0 %v426
      %438 = vmatpush.msra.mxu0 %v425
      %439 = vmatpush.msra.mxu0 %v424
      %440 = vmatpush.msra.mxu0 %v423
      %441 = vmatpush.msra.mxu0 %v422
      %442 = vmatpush.msra.mxu0 %v421
      %443 = vmatpush.msra.mxu0 %v420
      %444 = vmatpush.msra.mxu0 %v419
      %445 = vmatpush.msra.mxu0 %v418
      %446 = vmatpush.msra.mxu0 %v417
      %447 = vmatpush.msra.mxu0 %v416
      %448 = vmatmul.f32.gmra.mxu0 %v334
      %v449 = vpop.f32.mrf.mxu0
      %v450 = vadd.f32 0.0, %v449
      %451 = vmatmul.f32.gmra.mxu0 %v335
      %v452 = vpop.f32.mrf.mxu0
      %v453 = vadd.f32 0.0, %v452
      %454 = vdwg.mxu0
      %vm455 = vcmask 130048
      %v457 = vsel %vm455, %v236, 0
      %v460 = vsel %vm455, %v237, 0
      %462 = vmatpush.msra.mxu0 0.0
      %463 = vmatpush.msra.mxu0 0.0
      %464 = vmatpush.msra.mxu0 0.0
      %465 = vmatpush.msra.mxu0 0.0
      %466 = vmatpush.msra.mxu0 0.0
      %467 = vmatpush.msra.mxu0 0.0
      %468 = vmatpush.msra.mxu0 0.0
      %469 = vmatpush.msra.mxu0 0.0
      %470 = vmatpush.msra.mxu0 0.0
      %471 = vmatpush.msra.mxu0 0.0
      %472 = vmatpush.msra.mxu0 0.0
      %473 = vmatpush.msra.mxu0 0.0
      %474 = vmatpush.msra.mxu0 0.0
      %475 = vmatpush.msra.mxu0 0.0
      %476 = vmatpush.msra.mxu0 %v373
      %477 = vmatpush.msra.mxu0 %v370
      %478 = vmatmul.f32.gmra.mxu0 %v457
      %v479 = vpop.f32.mrf.mxu0
      %v480 = vadd.f32 %v410, %v479
      %481 = vmatmul.f32.gmra.mxu0 %v460
      %v482 = vpop.f32.mrf.mxu0
      %v483 = vadd.f32 %v413, %v482
      %484 = vdwg.mxu0
      %v486 = vsel %vm455, %v244, 0
      %v489 = vsel %vm455, %v245, 0
      %491 = vmatpush.msra.mxu0 0.0
      %492 = vmatpush.msra.mxu0 0.0
      %493 = vmatpush.msra.mxu0 0.0
      %494 = vmatpush.msra.mxu0 0.0
      %495 = vmatpush.msra.mxu0 0.0
      %496 = vmatpush.msra.mxu0 0.0
      %497 = vmatpush.msra.mxu0 0.0
      %498 = vmatpush.msra.mxu0 0.0
      %499 = vmatpush.msra.mxu0 0.0
      %500 = vmatpush.msra.mxu0 0.0
      %501 = vmatpush.msra.mxu0 0.0
      %502 = vmatpush.msra.mxu0 0.0
      %503 = vmatpush.msra.mxu0 0.0
      %504 = vmatpush.msra.mxu0 0.0
      %505 = vmatpush.msra.mxu0 %v453
      %506 = vmatpush.msra.mxu0 %v450
      %507 = vmatmul.f32.gmra.mxu0 %v486
      %v508 = vpop.f32.mrf.mxu0
      %v509 = vadd.f32 0.0, %v508
      %510 = vmatmul.f32.gmra.mxu0 %v489
      %v511 = vpop.f32.mrf.mxu0
      %v512 = vadd.f32 0.0, %v511
      %513 = vdwg.mxu0
      %v514 = vadd.f32 %v480, %v509
      %v515 = vadd.f32 %v483, %v512
      %v516 = vld [vmem:[%s2] sm:$0x1]
      %v518 = vperm.slane %v516, 0
      %v520 = vadd.f32 %v514, %v518
      %v521 = vadd.f32 %v515, %v518
      %v522 = vmul.f32 %v520, 0.5
      %v523 = vmul.f32 %v521, 0.5
      %v524 = vmul.f32 %v520, 0.70710677
      %v525 = vmul.f32 %v521, 0.70710677
      %v526 = vmul.f32 %v524, %v524
      %v527 = vmin.f32 16.0, %v526
      %v528 = vmul.f32 %v527, 2.1237322e-06
      %v529 = vadd.f32 %v528, 0.00028619796
      %v530 = vmul.f32 %v527, %v529
      %v531 = vadd.f32 %v530, 0.0036580483
      %v532 = vmul.f32 %v527, %v531
      %v533 = vadd.f32 %v532, 0.05243302
      %v534 = vmul.f32 %v527, %v533
      %v535 = vadd.f32 %v534, 0.18741608
      %v536 = vmul.f32 %v527, %v535
      %v537 = vadd.f32 %v536, 1.1283791
      %v538 = vmul.f32 %v524, %v537
      %v539 = vmul.f32 %v527, 3.8918573e-05
      %v540 = vadd.f32 %v539, 0.001143296
      %v541 = vmul.f32 %v527, %v540
      %v542 = vadd.f32 %v541, 0.014752088
      %v543 = vmul.f32 %v527, %v542
      %v544 = vadd.f32 %v543, 0.112945676
      %v545 = vmul.f32 %v527, %v544
      %v546 = vadd.f32 %v545, 0.4994258
      %v547 = vmul.f32 %v527, %v546
      %v548 = vadd.f32 %v547, 1.0
      %v549 = vrcp.pop %v548
      %v550 = vmul.f32 %v548, %v549
      %v551 = vsub.f32 1.0, %v550
      %v552 = vmul.f32 %v549, %v551
      %v553 = vadd.f32 %v549, %v552
      %vm554 = vweird.f32 %v548
      %vm555 = vweird.f32 %v549
      %vm556 = vmor %vm554, %vm555
      %v557 = vsel %vm556, %v549, %v553
      %v558 = vand.u32 2147483647, %v548
      %vm559 = vcmp.eq.f32.partialorder %v558, 8.507059e+37
      %v560 = vand.u32 %v548, 2147483648
      %v561 = vor.u32 1.1754944e-38, %v560
      %v562 = vsel %vm559, %v561, %v557
      %v563 = vmul.f32 %v538, %v562
      %v564 = vmin.f32 %v563, 1.0
      %v565 = vmax.f32 %v564, -1.0
      %v566 = vmul.f32 %v525, %v525
      %v567 = vmin.f32 16.0, %v566
      %v568 = vmul.f32 %v567, 2.1237322e-06
      %v569 = vadd.f32 %v568, 0.00028619796
      %v570 = vmul.f32 %v567, %v569
      %v571 = vadd.f32 %v570, 0.0036580483
      %v572 = vmul.f32 %v567, %v571
      %v573 = vadd.f32 %v572, 0.05243302
      %v574 = vmul.f32 %v567, %v573
      %v575 = vadd.f32 %v574, 0.18741608
      %v576 = vmul.f32 %v567, %v575
      %v577 = vadd.f32 %v576, 1.1283791
      %v578 = vmul.f32 %v525, %v577
      %v579 = vmul.f32 %v567, 3.8918573e-05
      %v580 = vadd.f32 %v579, 0.001143296
      %v581 = vmul.f32 %v567, %v580
      %v582 = vadd.f32 %v581, 0.014752088
      %v583 = vmul.f32 %v567, %v582
      %v584 = vadd.f32 %v583, 0.112945676
      %v585 = vmul.f32 %v567, %v584
      %v586 = vadd.f32 %v585, 0.4994258
      %v587 = vmul.f32 %v567, %v586
      %v588 = vadd.f32 %v587, 1.0
      %v589 = vrcp.pop %v588
      %v590 = vmul.f32 %v588, %v589
      %v591 = vsub.f32 1.0, %v590
      %v592 = vmul.f32 %v589, %v591
      %v593 = vadd.f32 %v589, %v592
      %vm594 = vweird.f32 %v588
      %vm595 = vweird.f32 %v589
      %vm596 = vmor %vm594, %vm595
      %v597 = vsel %vm596, %v589, %v593
      %v598 = vand.u32 2147483647, %v588
      %vm599 = vcmp.eq.f32.partialorder %v598, 8.507059e+37
      %v600 = vand.u32 %v588, 2147483648
      %v601 = vor.u32 1.1754944e-38, %v600
      %v602 = vsel %vm599, %v601, %v597
      %v603 = vmul.f32 %v578, %v602
      %v604 = vmin.f32 %v603, 1.0
      %v605 = vmax.f32 %v604, -1.0
      %v606 = vadd.f32 %v565, 1.0
      %v607 = vadd.f32 %v605, 1.0
      %v608 = vmul.f32 %v522, %v606
      %v609 = vmul.f32 %v523, %v607
      %v610 = vld [vmem:[%s3] sm:$0xff]
      %v611 = vld [vmem:[%s3 + $0x8] sm:$0xff]
      %v612 = vld [vmem:[%s3 + $0x10] sm:$0xff]
      %v613 = vld [vmem:[%s3 + $0x18] sm:$0xff]
      %v614 = vld [vmem:[%s3 + $0x20] sm:$0xff]
      %v615 = vld [vmem:[%s3 + $0x28] sm:$0xff]
      %v616 = vld [vmem:[%s3 + $0x30] sm:$0xff]
      %v617 = vld [vmem:[%s3 + $0x38] sm:$0xff]
      %v618 = vld [vmem:[%s3 + $0x40] sm:$0xff]
      %v619 = vld [vmem:[%s3 + $0x48] sm:$0xff]
      %v620 = vld [vmem:[%s3 + $0x50] sm:$0xff]
      %v621 = vld [vmem:[%s3 + $0x58] sm:$0xff]
      %v622 = vld [vmem:[%s3 + $0x60] sm:$0xff]
      %v623 = vld [vmem:[%s3 + $0x68] sm:$0xff]
      %v624 = vld [vmem:[%s3 + $0x70] sm:$0xff]
      %v625 = vld [vmem:[%s3 + $0x78] sm:$0xff]
      %626 = vmatpush.msra.mxu0 %v625
      %627 = vmatpush.msra.mxu0 %v624
      %628 = vmatpush.msra.mxu0 %v623
      %629 = vmatpush.msra.mxu0 %v622
      %630 = vmatpush.msra.mxu0 %v621
      %631 = vmatpush.msra.mxu0 %v620
      %632 = vmatpush.msra.mxu0 %v619
      %633 = vmatpush.msra.mxu0 %v618
      %634 = vmatpush.msra.mxu0 %v617
      %635 = vmatpush.msra.mxu0 %v616
      %636 = vmatpush.msra.mxu0 %v615
      %637 = vmatpush.msra.mxu0 %v614
      %638 = vmatpush.msra.mxu0 %v613
      %639 = vmatpush.msra.mxu0 %v612
      %640 = vmatpush.msra.mxu0 %v611
      %641 = vmatpush.msra.mxu0 %v610
      %642 = vmatmul.f32.gmra.mxu0 %v608
      %v643 = vpop.f32.mrf.mxu0
      %v644 = vadd.f32 0.0, %v643
      %645 = vmatmul.f32.gmra.mxu0 %v609
      %v646 = vpop.f32.mrf.mxu0
      %v647 = vadd.f32 0.0, %v646
      %648 = vdwg.mxu0
      %s649 = scalar_lea.vmem %s3, 128
      %v650 = vld [vmem:[%s649] sm:$0xff]
      %v651 = vld [vmem:[%s649 + $0x8] sm:$0xff]
      %v652 = vld [vmem:[%s649 + $0x10] sm:$0xff]
      %v653 = vld [vmem:[%s649 + $0x18] sm:$0xff]
      %v654 = vld [vmem:[%s649 + $0x20] sm:$0xff]
      %v655 = vld [vmem:[%s649 + $0x28] sm:$0xff]
      %v656 = vld [vmem:[%s649 + $0x30] sm:$0xff]
      %v657 = vld [vmem:[%s649 + $0x38] sm:$0xff]
      %v658 = vld [vmem:[%s649 + $0x40] sm:$0xff]
      %v659 = vld [vmem:[%s649 + $0x48] sm:$0xff]
      %v660 = vld [vmem:[%s649 + $0x50] sm:$0xff]
      %v661 = vld [vmem:[%s649 + $0x58] sm:$0xff]
      %v662 = vld [vmem:[%s649 + $0x60] sm:$0xff]
      %v663 = vld [vmem:[%s649 + $0x68] sm:$0xff]
      %v664 = vld [vmem:[%s649 + $0x70] sm:$0xff]
      %v665 = vld [vmem:[%s649 + $0x78] sm:$0xff]
      %666 = vmatpush.msra.mxu0 %v665
      %667 = vmatpush.msra.mxu0 %v664
      %668 = vmatpush.msra.mxu0 %v663
      %669 = vmatpush.msra.mxu0 %v662
      %670 = vmatpush.msra.mxu0 %v661
      %671 = vmatpush.msra.mxu0 %v660
      %672 = vmatpush.msra.mxu0 %v659
      %673 = vmatpush.msra.mxu0 %v658
      %674 = vmatpush.msra.mxu0 %v657
      %675 = vmatpush.msra.mxu0 %v656
      %676 = vmatpush.msra.mxu0 %v655
      %677 = vmatpush.msra.mxu0 %v654
      %678 = vmatpush.msra.mxu0 %v653
      %679 = vmatpush.msra.mxu0 %v652
      %680 = vmatpush.msra.mxu0 %v651
      %681 = vmatpush.msra.mxu0 %v650
      %682 = vmatmul.f32.gmra.mxu0 %v608
      %v683 = vpop.f32.mrf.mxu0
      %v684 = vadd.f32 0.0, %v683
      %685 = vmatmul.f32.gmra.mxu0 %v609
      %v686 = vpop.f32.mrf.mxu0
      %v687 = vadd.f32 0.0, %v686
      %688 = vdwg.mxu0
      %s689 = scalar_lea.vmem %s3, 256
      %v690 = vld [vmem:[%s689] sm:$0xff]
      %v691 = vld [vmem:[%s689 + $0x8] sm:$0xff]
      %v692 = vld [vmem:[%s689 + $0x10] sm:$0xff]
      %v693 = vld [vmem:[%s689 + $0x18] sm:$0xff]
      %v694 = vld [vmem:[%s689 + $0x20] sm:$0xff]
      %v695 = vld [vmem:[%s689 + $0x28] sm:$0xff]
      %v696 = vld [vmem:[%s689 + $0x30] sm:$0xff]
      %v697 = vld [vmem:[%s689 + $0x38] sm:$0xff]
      %v698 = vld [vmem:[%s689 + $0x40] sm:$0xff]
      %v699 = vld [vmem:[%s689 + $0x48] sm:$0xff]
      %v700 = vld [vmem:[%s689 + $0x50] sm:$0xff]
      %v701 = vld [vmem:[%s689 + $0x58] sm:$0xff]
      %v702 = vld [vmem:[%s689 + $0x60] sm:$0xff]
      %v703 = vld [vmem:[%s689 + $0x68] sm:$0xff]
      %v704 = vld [vmem:[%s689 + $0x70] sm:$0xff]
      %v705 = vld [vmem:[%s689 + $0x78] sm:$0xff]
      %706 = vmatpush.msra.mxu0 %v705
      %707 = vmatpush.msra.mxu0 %v704
      %708 = vmatpush.msra.mxu0 %v703
      %709 = vmatpush.msra.mxu0 %v702
      %710 = vmatpush.msra.mxu0 %v701
      %711 = vmatpush.msra.mxu0 %v700
      %712 = vmatpush.msra.mxu0 %v699
      %713 = vmatpush.msra.mxu0 %v698
      %714 = vmatpush.msra.mxu0 %v697
      %715 = vmatpush.msra.mxu0 %v696
      %716 = vmatpush.msra.mxu0 %v695
      %717 = vmatpush.msra.mxu0 %v694
      %718 = vmatpush.msra.mxu0 %v693
      %719 = vmatpush.msra.mxu0 %v692
      %720 = vmatpush.msra.mxu0 %v691
      %721 = vmatpush.msra.mxu0 %v690
      %722 = vmatmul.f32.gmra.mxu0 %v608
      %v723 = vpop.f32.mrf.mxu0
      %v724 = vadd.f32 0.0, %v723
      %725 = vmatmul.f32.gmra.mxu0 %v609
      %v726 = vpop.f32.mrf.mxu0
      %v727 = vadd.f32 0.0, %v726
      %728 = vdwg.mxu0
      %729 = vmatpush.msra.mxu0 0.0
      %730 = vmatpush.msra.mxu0 0.0
      %731 = vmatpush.msra.mxu0 0.0
      %732 = vmatpush.msra.mxu0 0.0
      %733 = vmatpush.msra.mxu0 0.0
      %734 = vmatpush.msra.mxu0 0.0
      %735 = vmatpush.msra.mxu0 0.0
      %736 = vmatpush.msra.mxu0 0.0
      %737 = vmatpush.msra.mxu0 0.0
      %738 = vmatpush.msra.mxu0 0.0
      %739 = vmatpush.msra.mxu0 0.0
      %740 = vmatpush.msra.mxu0 0.0
      %741 = vmatpush.msra.mxu0 0.0
      %742 = vmatpush.msra.mxu0 0.0
      %743 = vmatpush.msra.mxu0 %v647
      %744 = vmatpush.msra.mxu0 %v644
      %745 = vmatmul.f32.gmra.mxu0 %v457
      %v746 = vpop.f32.mrf.mxu0
      %v747 = vadd.f32 %v684, %v746
      %748 = vmatmul.f32.gmra.mxu0 %v460
      %v749 = vpop.f32.mrf.mxu0
      %v750 = vadd.f32 %v687, %v749
      %751 = vdwg.mxu0
      %752 = vmatpush.msra.mxu0 0.0
      %753 = vmatpush.msra.mxu0 0.0
      %754 = vmatpush.msra.mxu0 0.0
      %755 = vmatpush.msra.mxu0 0.0
      %756 = vmatpush.msra.mxu0 0.0
      %757 = vmatpush.msra.mxu0 0.0
      %758 = vmatpush.msra.mxu0 0.0
      %759 = vmatpush.msra.mxu0 0.0
      %760 = vmatpush.msra.mxu0 0.0
      %761 = vmatpush.msra.mxu0 0.0
      %762 = vmatpush.msra.mxu0 0.0
      %763 = vmatpush.msra.mxu0 0.0
      %764 = vmatpush.msra.mxu0 0.0
      %765 = vmatpush.msra.mxu0 0.0
      %766 = vmatpush.msra.mxu0 %v727
      %767 = vmatpush.msra.mxu0 %v724
      %768 = vmatmul.f32.gmra.mxu0 %v486
      %v769 = vpop.f32.mrf.mxu0
      %v770 = vadd.f32 0.0, %v769
      %771 = vmatmul.f32.gmra.mxu0 %v489
      %v772 = vpop.f32.mrf.mxu0
      %v773 = vadd.f32 0.0, %v772
      %774 = vdwg.mxu0
      %v775 = vadd.f32 %v747, %v770
      %v776 = vadd.f32 %v750, %v773
      %v777 = vld [vmem:[%s4] sm:$0x1]
      %v779 = vperm.slane %v777, 0
      %v781 = vadd.f32 %v775, %v779
      %v782 = vadd.f32 %v776, %v779
      %v783 = vadd.f32 %v246, %v781
      %v784 = vadd.f32 %v247, %v782
      %785 = vst [vmem:[%s224] sm:$0xff] %v783
      %786 = vst [vmem:[%s224 + $0x8] sm:$0xff] %v784
      %p787 = scmp.lt.s32.totalorder %s16, 1
      %s788 = scalar_select %p787, %s16, 1
      %s789 = smul.addr %s788, 2
      %s790 = smul.addr %s789, 8
      %s791 = scalar_lea.vmem %s5, %s790
      // Predicated region
      $region41: #{residual_conv_block.1} parent=39 // pred_check
        %p792 = pneg %p144
      $region42: #{residual_conv_block.1} parent=39 // pred_check_branch
        %794 = sbr.rel (%p792) target = $region44
      $region43: #{residual_conv_block.1} parent=39 // pred_region
        _
      $region44: #{residual_conv_block.1} parent=39 // pred_fallthru
        _
    $region40: #{residual_conv_block.1} parent=5 // pred_fallthru
      _
    %p795 = scmp.le.s32.totalorder 2, %s11
    // Predicated region
    $region45: #{residual_conv_block.1} parent=5 // pred_check
      %p796 = pneg %p795
    $region46: #{residual_conv_block.1} parent=5 // pred_check_branch
      %798 = sbr.rel (%p796) target = $region48
    $region47: #{residual_conv_block.1} parent=5 // pred_region
      %s799 = ssub.s32 %s11, 2
      // Predicated region
      $region49: #{residual_conv_block.1} parent=47 // pred_check
        %p800 = pneg %p150
      $region50: #{residual_conv_block.1} parent=47 // pred_check_branch
        %802 = sbr.rel (%p800) target = $region52
      $region51: #{residual_conv_block.1} parent=47 // pred_region
        %p803 = scmp.lt.s32.totalorder %s17, 1
        %s804 = scalar_select %p803, %s17, 1
        %s805 = smul.addr %s804, 2
        %s806 = smul.addr %s805, 8
        %s807 = scalar_lea.vmem %s5, %s806
      $region52: #{residual_conv_block.1} parent=47 // pred_fallthru
        _
    $region48: #{residual_conv_block.1} parent=5 // pred_fallthru
      _
  $region6: #{residual_conv_block.1} parent=0 // loop_footer
    %s15 = sadd.s32 1, %s11
  $region7: #{residual_conv_block.1} parent=0 // loop_footer_branch
    %10 = sbr.rel target = $region3
  $region8: #{residual_conv_block.1} parent=0 // loop_exit
    _

</llo_original>
